<compile_context>
chip_gen: v5e
topology: v5e:2x2
jax: 0.10.0
libtpu: 0.0.40
codegen_flags: <defaults>
</compile_context>

<pallas_src>
import jax
import jax.numpy as jnp
import numpy as np
from jax.experimental import pallas as pl
from jax.experimental.pallas import tpu as pltpu

_EPS = 1e-5
_LANES = 128


def _plain_kernel(x_ref, w_ref, b_ref, o_ref):
    # x_ref: (bt, C); w_ref/b_ref: (1, C)
    x = x_ref[...].astype(jnp.float32)
    mu = jnp.mean(x, axis=-1, keepdims=True)
    xc = x - mu
    var = jnp.mean(xc * xc, axis=-1, keepdims=True)  # population variance
    y = xc * jax.lax.rsqrt(var + _EPS)
    y = y * w_ref[...].astype(jnp.float32) + b_ref[...].astype(jnp.float32)
    o_ref[...] = y.astype(o_ref.dtype)


def _packed_kernel(x_ref, w_ref, b_ref, m_ref, o_ref):
    # x_ref: (bt, k*C) lane-dense (k logical rows per physical row).
    # m_ref: (k*C, k*C) block-diagonal matrix with 1/C inside each CxC block, so
    #        x @ m broadcasts each segment's mean to every lane of that segment.
    x = x_ref[...].astype(jnp.float32)
    m = m_ref[...]
    mu = jnp.dot(x, m, precision=jax.lax.Precision.HIGHEST,
                 preferred_element_type=jnp.float32)
    xc = x - mu
    var = jnp.dot(xc * xc, m, precision=jax.lax.Precision.HIGHEST,
                  preferred_element_type=jnp.float32)
    y = xc * jax.lax.rsqrt(var + _EPS)
    y = y * w_ref[...].astype(jnp.float32) + b_ref[...].astype(jnp.float32)
    o_ref[...] = y.astype(o_ref.dtype)


def _round_up(a, b):
    return (a + b - 1) // b * b


def with_bias_layer_norm(x, weight, bias, *, target_block_bytes=1 << 20):
    """x: [..., C]; weight, bias: [C]. LayerNorm over the last dim (WithBias)."""
    orig_shape = x.shape
    C = orig_shape[-1]
    rows = 1
    for d in orig_shape[:-1]:
        rows *= d
    dtype = x.dtype
    itemsize = jnp.dtype(dtype).itemsize
    sub = max(8, 32 // itemsize)  # 8 for f32, 16 for bf16 (packed sublanes)

    # Lane packing factor: fold k logical rows into one 128-lane physical row.
    if C < _LANES and _LANES % C == 0:
        k = _LANES // C
    else:
        k = 1
    lane_w = k * C

    x2 = x.reshape(rows, C)

    # ---- choose the (packed-)row tile bt and grid ----
    p_rows = -(-rows // k)                      # packed rows (ceil)
    row_bytes = lane_w * itemsize
    bt = max(sub, (target_block_bytes // row_bytes) // sub * sub)
    if p_rows <= bt:
        bt = _round_up(p_rows, sub)             # single block for tiny problems
        grid = 1
    else:
        grid = -(-p_rows // bt)                 # >= 2 -> both v7x TCs get work
        bt = _round_up(-(-p_rows // grid), sub)  # rebalance to minimize padding
    p_pad = grid * bt
    rows_pad = p_pad * k

    if rows_pad != rows:
        x2 = jnp.pad(x2, ((0, rows_pad - rows), (0, 0)))

    w_f = weight.astype(jnp.float32)
    b_f = bias.astype(jnp.float32)

    compiler_params = pltpu.CompilerParams(
        dimension_semantics=("parallel",),
        # >= default on v6e/v7x, raises v5e's 16 MiB default; blocks sized to
        # keep double-buffered in+out plus f32 temporaries well under this.
        vmem_limit_bytes=32 * 1024 * 1024,
    )

    if k > 1:
        xp = x2.reshape(p_ad := p_pad, lane_w)
        w2 = jnp.tile(w_f, (k,)).reshape(1, lane_w)
        b2 = jnp.tile(b_f, (k,)).reshape(1, lane_w)
        seg = np.arange(lane_w) // C
        m = jnp.asarray(
            (seg[:, None] == seg[None, :]).astype(np.float32) / float(C))

        out = pl.pallas_call(
            _packed_kernel,
            out_shape=jax.ShapeDtypeStruct((p_pad, lane_w), dtype),
            grid=(grid,),
            in_specs=[
                pl.BlockSpec((bt, lane_w), lambda i: (i, 0)),
                pl.BlockSpec((1, lane_w), lambda i: (0, 0)),
                pl.BlockSpec((1, lane_w), lambda i: (0, 0)),
                pl.BlockSpec((lane_w, lane_w), lambda i: (0, 0)),
            ],
            out_specs=pl.BlockSpec((bt, lane_w), lambda i: (i, 0)),
            compiler_params=compiler_params,
        )(xp, w2, b2, m)
        out = out.reshape(rows_pad, C)
    else:
        w2 = w_f.reshape(1, C)
        b2 = b_f.reshape(1, C)
        out = pl.pallas_call(
            _plain_kernel,
            out_shape=jax.ShapeDtypeStruct((rows_pad, C), dtype),
            grid=(grid,),
            in_specs=[
                pl.BlockSpec((bt, C), lambda i: (i, 0)),
                pl.BlockSpec((1, C), lambda i: (0, 0)),
                pl.BlockSpec((1, C), lambda i: (0, 0)),
            ],
            out_specs=pl.BlockSpec((bt, C), lambda i: (i, 0)),
            compiler_params=compiler_params,
        )(x2, w2, b2)

    if rows_pad != rows:
        out = out[:rows]
    return out.reshape(orig_shape)


def _reference(x, weight, bias):
    x32 = x.astype(jnp.float32)
    mu = jnp.mean(x32, axis=-1, keepdims=True)
    var = jnp.mean((x32 - mu) ** 2, axis=-1, keepdims=True)
    return ((x32 - mu) / jnp.sqrt(var + _EPS) * weight + bias).astype(x.dtype)


if __name__ == "__main__":
    key = jax.random.PRNGKey(0)

    # Main shape implied by the module's use in Pa_Former: [B, H*W, C]
    B, N, C = 2, 64, 32
    x = jax.random.normal(key, (B, N, C), dtype=jnp.float32)
    weight = jnp.ones((C,), dtype=jnp.float32)   # module init: ones
    bias = jnp.zeros((C,), dtype=jnp.float32)    # module init: zeros

    out = jax.block_until_ready(with_bias_layer_norm(x, weight, bias))
    ref = _reference(x, weight, bias)
    assert out.shape == ref.shape
    assert jnp.allclose(out, ref, atol=1e-5, rtol=1e-5), "mismatch (packed path)"

    # Packed path with row padding (rows not a multiple of the tile).
    k2 = jax.random.PRNGKey(1)
    x_b = jax.random.normal(k2, (1, 50, 32), dtype=jnp.float32)
    out_b = jax.block_until_ready(with_bias_layer_norm(x_b, weight, bias))
    assert jnp.allclose(out_b, _reference(x_b, weight, bias),
                        atol=1e-5, rtol=1e-5), "mismatch (padded packed path)"

    # Plain (unpacked) path: C that does not divide 128.
    k3 = jax.random.PRNGKey(2)
    Cp = 48
    x_c = jax.random.normal(k3, (2, 40, Cp), dtype=jnp.float32)
    w_c = jnp.ones((Cp,), dtype=jnp.float32)
    b_c = jnp.zeros((Cp,), dtype=jnp.float32)
    out_c = jax.block_until_ready(with_bias_layer_norm(x_c, w_c, b_c))
    assert jnp.allclose(out_c, _reference(x_c, w_c, b_c),
                        atol=1e-5, rtol=1e-5), "mismatch (plain path)"

    print("KERNEL_OK")
</pallas_src>

<mosaic_0001>
module attributes {stable_mosaic.version = 11 : i64} {
  func.func @_packed_kernel(%arg0: i32, %arg1: memref<32x128xf32, #tpu.memory_space<vmem>>, %arg2: memref<1x128xf32, #tpu.memory_space<vmem>>, %arg3: memref<1x128xf32, #tpu.memory_space<vmem>>, %arg4: memref<128x128xf32, #tpu.memory_space<vmem>>, %arg5: memref<32x128xf32, #tpu.memory_space<vmem>>) attributes {dimension_semantics = [#tpu.dimension_semantics<parallel>], iteration_bounds = array<i64: 1>, scalar_prefetch = 0 : i64, scratch_operands = 0 : i64, tpu.core_type = #tpu.core_type<tc>, window_params = [{transform_indices = @transform_0, window_bounds = array<i64: 32, 128>}, {pipeline_mode = #tpu.pipeline_mode<synchronous>, transform_indices = @transform_1, window_bounds = array<i64: 1, 128>}, {pipeline_mode = #tpu.pipeline_mode<synchronous>, transform_indices = @transform_2, window_bounds = array<i64: 1, 128>}, {pipeline_mode = #tpu.pipeline_mode<synchronous>, transform_indices = @transform_3, window_bounds = array<i64: 128, 128>}, {transform_indices = @transform_4, window_bounds = array<i64: 32, 128>}]} {
    %c0 = arith.constant 0 : index
    %c0_0 = arith.constant 0 : index
    %0 = vector.load %arg1[%c0, %c0_0] : memref<32x128xf32, #tpu.memory_space<vmem>>, vector<32x128xf32>
    %c0_1 = arith.constant 0 : index
    %c0_2 = arith.constant 0 : index
    %1 = vector.load %arg4[%c0_1, %c0_2] : memref<128x128xf32, #tpu.memory_space<vmem>>, vector<128x128xf32>
    %cst = arith.constant dense<0.000000e+00> : vector<32x128xf32>
    %2 = tpu.matmul %0, %1, %cst {dimension_numbers = #tpu.dot_dimension_numbers<[1], [0], [0], [1], [0, 0, 1, 1], [], []>, precision = #tpu.contract_precision<fp32>} : vector<32x128xf32>, vector<128x128xf32>, vector<32x128xf32> -> vector<32x128xf32>
    %3 = arith.subf %0, %2 : vector<32x128xf32>
    %4 = arith.mulf %3, %3 : vector<32x128xf32>
    %cst_3 = arith.constant dense<0.000000e+00> : vector<32x128xf32>
    %5 = tpu.matmul %4, %1, %cst_3 {dimension_numbers = #tpu.dot_dimension_numbers<[1], [0], [0], [1], [0, 0, 1, 1], [], []>, precision = #tpu.contract_precision<fp32>} : vector<32x128xf32>, vector<128x128xf32>, vector<32x128xf32> -> vector<32x128xf32>
    %cst_4 = arith.constant 9.99999974E-6 : f32
    %6 = vector.broadcast %cst_4 : f32 to vector<32x128xf32>
    %7 = arith.addf %5, %6 : vector<32x128xf32>
    %8 = math.rsqrt %7 : vector<32x128xf32>
    %9 = arith.mulf %3, %8 : vector<32x128xf32>
    %c0_5 = arith.constant 0 : index
    %c0_6 = arith.constant 0 : index
    %10 = vector.load %arg2[%c0_5, %c0_6] : memref<1x128xf32, #tpu.memory_space<vmem>>, vector<1x128xf32>
    %11 = vector.broadcast %10 : vector<1x128xf32> to vector<32x128xf32>
    %12 = arith.mulf %9, %11 : vector<32x128xf32>
    %c0_7 = arith.constant 0 : index
    %c0_8 = arith.constant 0 : index
    %13 = vector.load %arg3[%c0_7, %c0_8] : memref<1x128xf32, #tpu.memory_space<vmem>>, vector<1x128xf32>
    %14 = vector.broadcast %13 : vector<1x128xf32> to vector<32x128xf32>
    %15 = arith.addf %12, %14 : vector<32x128xf32>
    %c0_9 = arith.constant 0 : index
    %c0_10 = arith.constant 0 : index
    %16 = vector.load %arg5[%c0_9, %c0_10] : memref<32x128xf32, #tpu.memory_space<vmem>>, vector<32x128xf32>
    tpu.vector_store %arg5[%c0_9, %c0_10], %15 {strides = array<i32>} : memref<32x128xf32, #tpu.memory_space<vmem>>, vector<32x128xf32>,
    return
  }
  func.func @transform_0(%arg0: i32) -> (i32, i32) {
    %c0_i32 = arith.constant 0 : i32
    %c0_i32_0 = arith.constant 0 : i32
    return %arg0, %c0_i32 : i32, i32
  }
  func.func @transform_1(%arg0: i32) -> (i32, i32) {
    %c0_i32 = arith.constant 0 : i32
    %c0_i32_0 = arith.constant 0 : i32
    %c0_i32_1 = arith.constant 0 : i32
    return %c0_i32, %c0_i32_0 : i32, i32
  }
  func.func @transform_2(%arg0: i32) -> (i32, i32) {
    %c0_i32 = arith.constant 0 : i32
    %c0_i32_0 = arith.constant 0 : i32
    %c0_i32_1 = arith.constant 0 : i32
    return %c0_i32, %c0_i32_0 : i32, i32
  }
  func.func @transform_3(%arg0: i32) -> (i32, i32) {
    %c0_i32 = arith.constant 0 : i32
    %c0_i32_0 = arith.constant 0 : i32
    %c0_i32_1 = arith.constant 0 : i32
    return %c0_i32, %c0_i32_0 : i32, i32
  }
  func.func @transform_4(%arg0: i32) -> (i32, i32) {
    %c0_i32 = arith.constant 0 : i32
    %c0_i32_0 = arith.constant 0 : i32
    return %arg0, %c0_i32 : i32, i32
  }
}

</mosaic_0001>

<llo_original>
// kernel: tpu_custom_call.1
$region0: #{tpu_custom_call.1}
  #allocation0 [shape = 'u32[]', space=smem, size = 0x4, offset = 0x4, fixed_abs, tag = 'smem constant byte address 0x4 - core index']
  #allocation1 [shape = 'u32[72,128]{1,0:T(1,128)}', space=vmem, size = 0x9000, scoped, tag = 'internal scratch']
  %s0 = inlined_call_operand.hbm [shape: f32[32,128], index: 0, kind: input, shape index: {}]
  %s1 = inlined_call_operand.hbm [shape: f32[1,128], index: 1, kind: input, shape index: {}]
  %s2 = inlined_call_operand.vmem [shape: f32[1,128], index: 2, kind: input, shape index: {}]
  %s3 = inlined_call_operand.hbm [shape: f32[128,128], index: 3, kind: input, shape index: {}]
  %s4 = inlined_call_operand.hbm [shape: f32[32,128], index: 4, kind: output, shape index: {}]
  %s5 = sld [smem:[#allocation0]]
  $region38: #{tpu_custom_call.1} parent=0
    _
  %s7 = ssub.s32 1, %s5
  %s8 = scalar_select 0, %s7, %s5
  $region1: #{tpu_custom_call.1} parent=0
    #allocation2 [shape = 'u8[16384]{0}', space=vmem, size = 0x4000, scoped, tag = 'input window, operand 0, single buffered']
    #allocation3 [shape = 's32[1]{0}', space=sflag, size = 0x4, scoped, tag = 'scoped memory for tpu_custom_call.1']
    #allocation4 [shape = 's32[1]{0}', space=sflag, size = 0x4, scoped, tag = 'scoped memory for tpu_custom_call.1']
    #allocation5 [shape = 'u8[512]{0}', space=vmem, size = 0x400, scoped, tag = 'input window, operand 1, single buffered']
    #allocation6 [shape = 's32[1]{0}', space=sflag, size = 0x4, scoped, tag = 'scoped memory for tpu_custom_call.1']
    #allocation7 [shape = 'u8[65536]{0}', space=vmem, size = 0x10000, scoped, tag = 'input window, operand 3, single buffered']
    #allocation8 [shape = 'u8[16384]{0}', space=vmem, size = 0x4000, scoped, tag = 'output window, operand 0, single buffered']
    %9 = vsyncpa [#allocation3], 0
    %10 = vsyncpa [#allocation6], 0
    %11 = vsyncpa [#allocation4], 0
    // Predicated region
    $region2: #{tpu_custom_call.1} parent=1 // pred_check
      _
    $region3: #{tpu_custom_call.1} parent=1 // pred_check_branch
      %13 = sbr.rel (0) target = $region5
    $region4: #{tpu_custom_call.1} parent=1 // pred_region
      %15 = vsyncadd [#allocation3], 0
      %s16 = sshll.u32 %s0, 4
      %s17 = int_to_ptr.hbm [resolvable:$true] %s16
      %s18 = sshll.u32 [#allocation2], 4
      %s19 = int_to_ptr.vmem [resolvable:$true] %s18
      %24 = dma.hbm_to_vmem [thread:$0]  %s17, 512, %s19, [#allocation3], 128, 128, 8
    $region5: #{tpu_custom_call.1} parent=1 // pred_fallthru
      _
    // Predicated region
    $region6: #{tpu_custom_call.1} parent=1 // pred_check
      _
    $region7: #{tpu_custom_call.1} parent=1 // pred_check_branch
      %26 = sbr.rel (0) target = $region9
    $region8: #{tpu_custom_call.1} parent=1 // pred_region
      %28 = vsyncadd [#allocation6], 0
      %s30 = sshll.u32 %s1, 4
      %s31 = int_to_ptr.hbm [resolvable:$true] %s30
      %s32 = sshll.u32 [#allocation5], 4
      %s33 = int_to_ptr.vmem [resolvable:$true] %s32
      %35 = dma.hbm_to_vmem [thread:$0]  %s31, 16, %s33, [#allocation6]
    $region9: #{tpu_custom_call.1} parent=1 // pred_fallthru
      _
    // Predicated region
    $region10: #{tpu_custom_call.1} parent=1 // pred_check
      _
    $region11: #{tpu_custom_call.1} parent=1 // pred_check_branch
      %37 = sbr.rel (0) target = $region13
    $region12: #{tpu_custom_call.1} parent=1 // pred_region
      _
    $region13: #{tpu_custom_call.1} parent=1 // pred_fallthru
      _
    // Predicated region
    $region14: #{tpu_custom_call.1} parent=1 // pred_check
      _
    $region15: #{tpu_custom_call.1} parent=1 // pred_check_branch
      %39 = sbr.rel (0) target = $region17
    $region16: #{tpu_custom_call.1} parent=1 // pred_region
      %41 = vsyncadd [#allocation6], 0
      %s42 = sshll.u32 %s3, 4
      %s43 = int_to_ptr.hbm [resolvable:$true] %s42
      %s44 = sshll.u32 [#allocation7], 4
      %s45 = int_to_ptr.vmem [resolvable:$true] %s44
      %50 = dma.hbm_to_vmem [thread:$0]  %s43, 2048, %s45, [#allocation6], 128, 128, 8
    $region17: #{tpu_custom_call.1} parent=1 // pred_fallthru
      _
    // Predicated region
    $region18: #{tpu_custom_call.1} parent=1 // pred_check
      _
    $region19: #{tpu_custom_call.1} parent=1 // pred_check_branch
      %52 = sbr.rel (0) target = $region21
    $region20: #{tpu_custom_call.1} parent=1 // pred_region
      %54 = dma.done [#allocation3], 512
    $region21: #{tpu_custom_call.1} parent=1 // pred_fallthru
      _
    // Predicated region
    $region22: #{tpu_custom_call.1} parent=1 // pred_check
      _
    $region23: #{tpu_custom_call.1} parent=1 // pred_check_branch
      %56 = sbr.rel (0) target = $region25
    $region24: #{tpu_custom_call.1} parent=1 // pred_region
      %58 = dma.done [#allocation6], 16
    $region25: #{tpu_custom_call.1} parent=1 // pred_fallthru
      _
    // Predicated region
    $region26: #{tpu_custom_call.1} parent=1 // pred_check
      _
    $region27: #{tpu_custom_call.1} parent=1 // pred_check_branch
      %60 = sbr.rel (0) target = $region29
    $region28: #{tpu_custom_call.1} parent=1 // pred_region
      %62 = dma.done [#allocation6], 2048
    $region29: #{tpu_custom_call.1} parent=1 // pred_fallthru
      _
    %v63 = vld [vmem:[#allocation2] sm:$0xff]
    %v64 = vld [vmem:[#allocation2 + $0x8] sm:$0xff]
    %v65 = vld [vmem:[#allocation2 + $0x10] sm:$0xff]
    %v66 = vld [vmem:[#allocation2 + $0x18] sm:$0xff]
    %v67 = vld [vmem:[#allocation7] sm:$0xff]
    %v68 = vld [vmem:[#allocation7 + $0x8] sm:$0xff]
    %v69 = vld [vmem:[#allocation7 + $0x10] sm:$0xff]
    %v70 = vld [vmem:[#allocation7 + $0x18] sm:$0xff]
    %v71 = vld [vmem:[#allocation7 + $0x20] sm:$0xff]
    %v72 = vld [vmem:[#allocation7 + $0x28] sm:$0xff]
    %v73 = vld [vmem:[#allocation7 + $0x30] sm:$0xff]
    %v74 = vld [vmem:[#allocation7 + $0x38] sm:$0xff]
    %v75 = vld [vmem:[#allocation7 + $0x40] sm:$0xff]
    %v76 = vld [vmem:[#allocation7 + $0x48] sm:$0xff]
    %v77 = vld [vmem:[#allocation7 + $0x50] sm:$0xff]
    %v78 = vld [vmem:[#allocation7 + $0x58] sm:$0xff]
    %v79 = vld [vmem:[#allocation7 + $0x60] sm:$0xff]
    %v80 = vld [vmem:[#allocation7 + $0x68] sm:$0xff]
    %v81 = vld [vmem:[#allocation7 + $0x70] sm:$0xff]
    %v82 = vld [vmem:[#allocation7 + $0x78] sm:$0xff]
    %v83 = vand.u32 %v82, 4294901760
    %84 = vmatpush.msra.mxu0 %v83
    %v85 = vand.u32 %v81, 4294901760
    %86 = vmatpush.msra.mxu0 %v85
    %v87 = vand.u32 %v80, 4294901760
    %88 = vmatpush.msra.mxu0 %v87
    %v89 = vand.u32 %v79, 4294901760
    %90 = vmatpush.msra.mxu0 %v89
    %v91 = vand.u32 %v78, 4294901760
    %92 = vmatpush.msra.mxu0 %v91
    %v93 = vand.u32 %v77, 4294901760
    %94 = vmatpush.msra.mxu0 %v93
    %v95 = vand.u32 %v76, 4294901760
    %96 = vmatpush.msra.mxu0 %v95
    %v97 = vand.u32 %v75, 4294901760
    %98 = vmatpush.msra.mxu0 %v97
    %v99 = vand.u32 %v74, 4294901760
    %100 = vmatpush.msra.mxu0 %v99
    %v101 = vand.u32 %v73, 4294901760
    %102 = vmatpush.msra.mxu0 %v101
    %v103 = vand.u32 %v72, 4294901760
    %104 = vmatpush.msra.mxu0 %v103
    %v105 = vand.u32 %v71, 4294901760
    %106 = vmatpush.msra.mxu0 %v105
    %v107 = vand.u32 %v70, 4294901760
    %108 = vmatpush.msra.mxu0 %v107
    %v109 = vand.u32 %v69, 4294901760
    %110 = vmatpush.msra.mxu0 %v109
    %v111 = vand.u32 %v68, 4294901760
    %112 = vmatpush.msra.mxu0 %v111
    %v113 = vand.u32 %v67, 4294901760
    %114 = vmatpush.msra.mxu0 %v113
    %v115 = vand.u32 %v63, 4294901760
    %v116 = vsub.f32 %v63, %v115
    %v117 = vand.u32 %v116, 4294901760
    %v118 = vsub.f32 %v116, %v117
    %v119 = vand.u32 %v118, 4294901760
    %120 = vmatmul.f32.gmra.mxu0 %v119
    %v121 = vpop.f32.mrf.mxu0
    %v122 = vadd.f32 0.0, %v121
    %v123 = vand.u32 %v64, 4294901760
    %v124 = vsub.f32 %v64, %v123
    %v125 = vand.u32 %v124, 4294901760
    %v126 = vsub.f32 %v124, %v125
    %v127 = vand.u32 %v126, 4294901760
    %128 = vmatmul.f32.gmra.mxu0 %v127
    %v129 = vpop.f32.mrf.mxu0
    %v130 = vadd.f32 0.0, %v129
    %v131 = vand.u32 %v65, 4294901760
    %v132 = vsub.f32 %v65, %v131
    %v133 = vand.u32 %v132, 4294901760
    %v134 = vsub.f32 %v132, %v133
    %v135 = vand.u32 %v134, 4294901760
    %136 = vmatmul.f32.gmra.mxu0 %v135
    %v137 = vpop.f32.mrf.mxu0
    %v138 = vadd.f32 0.0, %v137
    %v139 = vand.u32 %v66, 4294901760
    %v140 = vsub.f32 %v66, %v139
    %v141 = vand.u32 %v140, 4294901760
    %v142 = vsub.f32 %v140, %v141
    %v143 = vand.u32 %v142, 4294901760
    %144 = vmatmul.f32.gmra.mxu0 %v143
    %v145 = vpop.f32.mrf.mxu0
    %v146 = vadd.f32 0.0, %v145
    %147 = vdwg.mxu0
    %v148 = vand.u32 %v82, 4294901760
    %v149 = vsub.f32 %v82, %v148
    %v150 = vand.u32 %v149, 4294901760
    %v151 = vsub.f32 %v149, %v150
    %v152 = vand.u32 %v151, 4294901760
    %153 = vmatpush.msra.mxu0 %v152
    %v154 = vand.u32 %v81, 4294901760
    %v155 = vsub.f32 %v81, %v154
    %v156 = vand.u32 %v155, 4294901760
    %v157 = vsub.f32 %v155, %v156
    %v158 = vand.u32 %v157, 4294901760
    %159 = vmatpush.msra.mxu0 %v158
    %v160 = vand.u32 %v80, 4294901760
    %v161 = vsub.f32 %v80, %v160
    %v162 = vand.u32 %v161, 4294901760
    %v163 = vsub.f32 %v161, %v162
    %v164 = vand.u32 %v163, 4294901760
    %165 = vmatpush.msra.mxu0 %v164
    %v166 = vand.u32 %v79, 4294901760
    %v167 = vsub.f32 %v79, %v166
    %v168 = vand.u32 %v167, 4294901760
    %v169 = vsub.f32 %v167, %v168
    %v170 = vand.u32 %v169, 4294901760
    %171 = vmatpush.msra.mxu0 %v170
    %v172 = vand.u32 %v78, 4294901760
    %v173 = vsub.f32 %v78, %v172
    %v174 = vand.u32 %v173, 4294901760
    %v175 = vsub.f32 %v173, %v174
    %v176 = vand.u32 %v175, 4294901760
    %177 = vmatpush.msra.mxu0 %v176
    %v178 = vand.u32 %v77, 4294901760
    %v179 = vsub.f32 %v77, %v178
    %v180 = vand.u32 %v179, 4294901760
    %v181 = vsub.f32 %v179, %v180
    %v182 = vand.u32 %v181, 4294901760
    %183 = vmatpush.msra.mxu0 %v182
    %v184 = vand.u32 %v76, 4294901760
    %v185 = vsub.f32 %v76, %v184
    %v186 = vand.u32 %v185, 4294901760
    %v187 = vsub.f32 %v185, %v186
    %v188 = vand.u32 %v187, 4294901760
    %189 = vmatpush.msra.mxu0 %v188
    %v190 = vand.u32 %v75, 4294901760
    %v191 = vsub.f32 %v75, %v190
    %v192 = vand.u32 %v191, 4294901760
    %v193 = vsub.f32 %v191, %v192
    %v194 = vand.u32 %v193, 4294901760
    %195 = vmatpush.msra.mxu0 %v194
    %v196 = vand.u32 %v74, 4294901760
    %v197 = vsub.f32 %v74, %v196
    %v198 = vand.u32 %v197, 4294901760
    %v199 = vsub.f32 %v197, %v198
    %v200 = vand.u32 %v199, 4294901760
    %201 = vmatpush.msra.mxu0 %v200
    %v202 = vand.u32 %v73, 4294901760
    %v203 = vsub.f32 %v73, %v202
    %v204 = vand.u32 %v203, 4294901760
    %v205 = vsub.f32 %v203, %v204
    %v206 = vand.u32 %v205, 4294901760
    %207 = vmatpush.msra.mxu0 %v206
    %v208 = vand.u32 %v72, 4294901760
    %v209 = vsub.f32 %v72, %v208
    %v210 = vand.u32 %v209, 4294901760
    %v211 = vsub.f32 %v209, %v210
    %v212 = vand.u32 %v211, 4294901760
    %213 = vmatpush.msra.mxu0 %v212
    %v214 = vand.u32 %v71, 4294901760
    %v215 = vsub.f32 %v71, %v214
    %v216 = vand.u32 %v215, 4294901760
    %v217 = vsub.f32 %v215, %v216
    %v218 = vand.u32 %v217, 4294901760
    %219 = vmatpush.msra.mxu0 %v218
    %v220 = vand.u32 %v70, 4294901760
    %v221 = vsub.f32 %v70, %v220
    %v222 = vand.u32 %v221, 4294901760
    %v223 = vsub.f32 %v221, %v222
    %v224 = vand.u32 %v223, 4294901760
    %225 = vmatpush.msra.mxu0 %v224
    %v226 = vand.u32 %v69, 4294901760
    %v227 = vsub.f32 %v69, %v226
    %v228 = vand.u32 %v227, 4294901760
    %v229 = vsub.f32 %v227, %v228
    %v230 = vand.u32 %v229, 4294901760
    %231 = vmatpush.msra.mxu0 %v230
    %v232 = vand.u32 %v68, 4294901760
    %v233 = vsub.f32 %v68, %v232
    %v234 = vand.u32 %v233, 4294901760
    %v235 = vsub.f32 %v233, %v234
    %v236 = vand.u32 %v235, 4294901760
    %237 = vmatpush.msra.mxu0 %v236
    %v238 = vand.u32 %v67, 4294901760
    %v239 = vsub.f32 %v67, %v238
    %v240 = vand.u32 %v239, 4294901760
    %v241 = vsub.f32 %v239, %v240
    %v242 = vand.u32 %v241, 4294901760
    %243 = vmatpush.msra.mxu0 %v242
    %v244 = vand.u32 %v63, 4294901760
    %245 = vmatmul.f32.gmra.mxu0 %v244
    %v246 = vpop.f32.mrf.mxu0
    %v247 = vadd.f32 %v122, %v246
    %v248 = vand.u32 %v64, 4294901760
    %249 = vmatmul.f32.gmra.mxu0 %v248
    %v250 = vpop.f32.mrf.mxu0
    %v251 = vadd.f32 %v130, %v250
    %v252 = vand.u32 %v65, 4294901760
    %253 = vmatmul.f32.gmra.mxu0 %v252
    %v254 = vpop.f32.mrf.mxu0
    %v255 = vadd.f32 %v138, %v254
    %v256 = vand.u32 %v66, 4294901760
    %257 = vmatmul.f32.gmra.mxu0 %v256
    %v258 = vpop.f32.mrf.mxu0
    %v259 = vadd.f32 %v146, %v258
    %260 = vdwg.mxu0
    %v261 = vand.u32 %v82, 4294901760
    %v262 = vsub.f32 %v82, %v261
    %263 = vmatpush.msra.mxu0 %v262
    %v264 = vand.u32 %v81, 4294901760
    %v265 = vsub.f32 %v81, %v264
    %266 = vmatpush.msra.mxu0 %v265
    %v267 = vand.u32 %v80, 4294901760
    %v268 = vsub.f32 %v80, %v267
    %269 = vmatpush.msra.mxu0 %v268
    %v270 = vand.u32 %v79, 4294901760
    %v271 = vsub.f32 %v79, %v270
    %272 = vmatpush.msra.mxu0 %v271
    %v273 = vand.u32 %v78, 4294901760
    %v274 = vsub.f32 %v78, %v273
    %275 = vmatpush.msra.mxu0 %v274
    %v276 = vand.u32 %v77, 4294901760
    %v277 = vsub.f32 %v77, %v276
    %278 = vmatpush.msra.mxu0 %v277
    %v279 = vand.u32 %v76, 4294901760
    %v280 = vsub.f32 %v76, %v279
    %281 = vmatpush.msra.mxu0 %v280
    %v282 = vand.u32 %v75, 4294901760
    %v283 = vsub.f32 %v75, %v282
    %284 = vmatpush.msra.mxu0 %v283
    %v285 = vand.u32 %v74, 4294901760
    %v286 = vsub.f32 %v74, %v285
    %287 = vmatpush.msra.mxu0 %v286
    %v288 = vand.u32 %v73, 4294901760
    %v289 = vsub.f32 %v73, %v288
    %290 = vmatpush.msra.mxu0 %v289
    %v291 = vand.u32 %v72, 4294901760
    %v292 = vsub.f32 %v72, %v291
    %293 = vmatpush.msra.mxu0 %v292
    %v294 = vand.u32 %v71, 4294901760
    %v295 = vsub.f32 %v71, %v294
    %296 = vmatpush.msra.mxu0 %v295
    %v297 = vand.u32 %v70, 4294901760
    %v298 = vsub.f32 %v70, %v297
    %299 = vmatpush.msra.mxu0 %v298
    %v300 = vand.u32 %v69, 4294901760
    %v301 = vsub.f32 %v69, %v300
    %302 = vmatpush.msra.mxu0 %v301
    %v303 = vand.u32 %v68, 4294901760
    %v304 = vsub.f32 %v68, %v303
    %305 = vmatpush.msra.mxu0 %v304
    %v306 = vand.u32 %v67, 4294901760
    %v307 = vsub.f32 %v67, %v306
    %308 = vmatpush.msra.mxu0 %v307
    %v309 = vand.u32 %v63, 4294901760
    %v310 = vsub.f32 %v63, %v309
    %311 = vmatmul.f32.gmra.mxu0 %v310
    %v312 = vpop.f32.mrf.mxu0
    %v313 = vadd.f32 %v247, %v312
    %v314 = vand.u32 %v64, 4294901760
    %v315 = vsub.f32 %v64, %v314
    %316 = vmatmul.f32.gmra.mxu0 %v315
    %v317 = vpop.f32.mrf.mxu0
    %v318 = vadd.f32 %v251, %v317
    %v319 = vand.u32 %v65, 4294901760
    %v320 = vsub.f32 %v65, %v319
    %321 = vmatmul.f32.gmra.mxu0 %v320
    %v322 = vpop.f32.mrf.mxu0
    %v323 = vadd.f32 %v255, %v322
    %v324 = vand.u32 %v66, 4294901760
    %v325 = vsub.f32 %v66, %v324
    %326 = vmatmul.f32.gmra.mxu0 %v325
    %v327 = vpop.f32.mrf.mxu0
    %v328 = vadd.f32 %v259, %v327
    %329 = vdwg.mxu0
    %v330 = vand.u32 %v82, 4294901760
    %331 = vmatpush.msra.mxu0 %v330
    %v332 = vand.u32 %v81, 4294901760
    %333 = vmatpush.msra.mxu0 %v332
    %v334 = vand.u32 %v80, 4294901760
    %335 = vmatpush.msra.mxu0 %v334
    %v336 = vand.u32 %v79, 4294901760
    %337 = vmatpush.msra.mxu0 %v336
    %v338 = vand.u32 %v78, 4294901760
    %339 = vmatpush.msra.mxu0 %v338
    %v340 = vand.u32 %v77, 4294901760
    %341 = vmatpush.msra.mxu0 %v340
    %v342 = vand.u32 %v76, 4294901760
    %343 = vmatpush.msra.mxu0 %v342
    %v344 = vand.u32 %v75, 4294901760
    %345 = vmatpush.msra.mxu0 %v344
    %v346 = vand.u32 %v74, 4294901760
    %347 = vmatpush.msra.mxu0 %v346
    %v348 = vand.u32 %v73, 4294901760
    %349 = vmatpush.msra.mxu0 %v348
    %v350 = vand.u32 %v72, 4294901760
    %351 = vmatpush.msra.mxu0 %v350
    %v352 = vand.u32 %v71, 4294901760
    %353 = vmatpush.msra.mxu0 %v352
    %v354 = vand.u32 %v70, 4294901760
    %355 = vmatpush.msra.mxu0 %v354
    %v356 = vand.u32 %v69, 4294901760
    %357 = vmatpush.msra.mxu0 %v356
    %v358 = vand.u32 %v68, 4294901760
    %359 = vmatpush.msra.mxu0 %v358
    %v360 = vand.u32 %v67, 4294901760
    %361 = vmatpush.msra.mxu0 %v360
    %v362 = vand.u32 %v63, 4294901760
    %v363 = vsub.f32 %v63, %v362
    %v364 = vand.u32 %v363, 4294901760
    %365 = vmatmul.f32.gmra.mxu0 %v364
    %v366 = vpop.f32.mrf.mxu0
    %v367 = vadd.f32 %v313, %v366
    %v368 = vand.u32 %v64, 4294901760
    %v369 = vsub.f32 %v64, %v368
    %v370 = vand.u32 %v369, 4294901760
    %371 = vmatmul.f32.gmra.mxu0 %v370
    %v372 = vpop.f32.mrf.mxu0
    %v373 = vadd.f32 %v318, %v372
    %v374 = vand.u32 %v65, 4294901760
    %v375 = vsub.f32 %v65, %v374
    %v376 = vand.u32 %v375, 4294901760
    %377 = vmatmul.f32.gmra.mxu0 %v376
    %v378 = vpop.f32.mrf.mxu0
    %v379 = vadd.f32 %v323, %v378
    %v380 = vand.u32 %v66, 4294901760
    %v381 = vsub.f32 %v66, %v380
    %v382 = vand.u32 %v381, 4294901760
    %383 = vmatmul.f32.gmra.mxu0 %v382
    %v384 = vpop.f32.mrf.mxu0
    %v385 = vadd.f32 %v328, %v384
    %386 = vdwg.mxu0
    %v387 = vand.u32 %v82, 4294901760
    %v388 = vsub.f32 %v82, %v387
    %v389 = vand.u32 %v388, 4294901760
    %390 = vmatpush.msra.mxu0 %v389
    %v391 = vand.u32 %v81, 4294901760
    %v392 = vsub.f32 %v81, %v391
    %v393 = vand.u32 %v392, 4294901760
    %394 = vmatpush.msra.mxu0 %v393
    %v395 = vand.u32 %v80, 4294901760
    %v396 = vsub.f32 %v80, %v395
    %v397 = vand.u32 %v396, 4294901760
    %398 = vmatpush.msra.mxu0 %v397
    %v399 = vand.u32 %v79, 4294901760
    %v400 = vsub.f32 %v79, %v399
    %v401 = vand.u32 %v400, 4294901760
    %402 = vmatpush.msra.mxu0 %v401
    %v403 = vand.u32 %v78, 4294901760
    %v404 = vsub.f32 %v78, %v403
    %v405 = vand.u32 %v404, 4294901760
    %406 = vmatpush.msra.mxu0 %v405
    %v407 = vand.u32 %v77, 4294901760
    %v408 = vsub.f32 %v77, %v407
    %v409 = vand.u32 %v408, 4294901760
    %410 = vmatpush.msra.mxu0 %v409
    %v411 = vand.u32 %v76, 4294901760
    %v412 = vsub.f32 %v76, %v411
    %v413 = vand.u32 %v412, 4294901760
    %414 = vmatpush.msra.mxu0 %v413
    %v415 = vand.u32 %v75, 4294901760
    %v416 = vsub.f32 %v75, %v415
    %v417 = vand.u32 %v416, 4294901760
    %418 = vmatpush.msra.mxu0 %v417
    %v419 = vand.u32 %v74, 4294901760
    %v420 = vsub.f32 %v74, %v419
    %v421 = vand.u32 %v420, 4294901760
    %422 = vmatpush.msra.mxu0 %v421
    %v423 = vand.u32 %v73, 4294901760
    %v424 = vsub.f32 %v73, %v423
    %v425 = vand.u32 %v424, 4294901760
    %426 = vmatpush.msra.mxu0 %v425
    %v427 = vand.u32 %v72, 4294901760
    %v428 = vsub.f32 %v72, %v427
    %v429 = vand.u32 %v428, 4294901760
    %430 = vmatpush.msra.mxu0 %v429
    %v431 = vand.u32 %v71, 4294901760
    %v432 = vsub.f32 %v71, %v431
    %v433 = vand.u32 %v432, 4294901760
    %434 = vmatpush.msra.mxu0 %v433
    %v435 = vand.u32 %v70, 4294901760
    %v436 = vsub.f32 %v70, %v435
    %v437 = vand.u32 %v436, 4294901760
    %438 = vmatpush.msra.mxu0 %v437
    %v439 = vand.u32 %v69, 4294901760
    %v440 = vsub.f32 %v69, %v439
    %v441 = vand.u32 %v440, 4294901760
    %442 = vmatpush.msra.mxu0 %v441
    %v443 = vand.u32 %v68, 4294901760
    %v444 = vsub.f32 %v68, %v443
    %v445 = vand.u32 %v444, 4294901760
    %446 = vmatpush.msra.mxu0 %v445
    %v447 = vand.u32 %v67, 4294901760
    %v448 = vsub.f32 %v67, %v447
    %v449 = vand.u32 %v448, 4294901760
    %450 = vmatpush.msra.mxu0 %v449
    %v451 = vand.u32 %v63, 4294901760
    %452 = vmatmul.f32.gmra.mxu0 %v451
    %v453 = vpop.f32.mrf.mxu0
    %v454 = vadd.f32 %v367, %v453
    %v455 = vand.u32 %v64, 4294901760
    %456 = vmatmul.f32.gmra.mxu0 %v455
    %v457 = vpop.f32.mrf.mxu0
    %v458 = vadd.f32 %v373, %v457
    %v459 = vand.u32 %v65, 4294901760
    %460 = vmatmul.f32.gmra.mxu0 %v459
    %v461 = vpop.f32.mrf.mxu0
    %v462 = vadd.f32 %v379, %v461
    %v463 = vand.u32 %v66, 4294901760
    %464 = vmatmul.f32.gmra.mxu0 %v463
    %v465 = vpop.f32.mrf.mxu0
    %v466 = vadd.f32 %v385, %v465
    %467 = vdwg.mxu0
    %v468 = vand.u32 %v82, 4294901760
    %469 = vmatpush.msra.mxu0 %v468
    %v470 = vand.u32 %v81, 4294901760
    %471 = vmatpush.msra.mxu0 %v470
    %v472 = vand.u32 %v80, 4294901760
    %473 = vmatpush.msra.mxu0 %v472
    %v474 = vand.u32 %v79, 4294901760
    %475 = vmatpush.msra.mxu0 %v474
    %v476 = vand.u32 %v78, 4294901760
    %477 = vmatpush.msra.mxu0 %v476
    %v478 = vand.u32 %v77, 4294901760
    %479 = vmatpush.msra.mxu0 %v478
    %v480 = vand.u32 %v76, 4294901760
    %481 = vmatpush.msra.mxu0 %v480
    %v482 = vand.u32 %v75, 4294901760
    %483 = vmatpush.msra.mxu0 %v482
    %v484 = vand.u32 %v74, 4294901760
    %485 = vmatpush.msra.mxu0 %v484
    %v486 = vand.u32 %v73, 4294901760
    %487 = vmatpush.msra.mxu0 %v486
    %v488 = vand.u32 %v72, 4294901760
    %489 = vmatpush.msra.mxu0 %v488
    %v490 = vand.u32 %v71, 4294901760
    %491 = vmatpush.msra.mxu0 %v490
    %v492 = vand.u32 %v70, 4294901760
    %493 = vmatpush.msra.mxu0 %v492
    %v494 = vand.u32 %v69, 4294901760
    %495 = vmatpush.msra.mxu0 %v494
    %v496 = vand.u32 %v68, 4294901760
    %497 = vmatpush.msra.mxu0 %v496
    %v498 = vand.u32 %v67, 4294901760
    %499 = vmatpush.msra.mxu0 %v498
    %v500 = vand.u32 %v63, 4294901760
    %501 = vmatmul.f32.gmra.mxu0 %v500
    %v502 = vpop.f32.mrf.mxu0
    %v503 = vadd.f32 %v454, %v502
    %v504 = vand.u32 %v64, 4294901760
    %505 = vmatmul.f32.gmra.mxu0 %v504
    %v506 = vpop.f32.mrf.mxu0
    %v507 = vadd.f32 %v458, %v506
    %v508 = vand.u32 %v65, 4294901760
    %509 = vmatmul.f32.gmra.mxu0 %v508
    %v510 = vpop.f32.mrf.mxu0
    %v511 = vadd.f32 %v462, %v510
    %v512 = vand.u32 %v66, 4294901760
    %513 = vmatmul.f32.gmra.mxu0 %v512
    %v514 = vpop.f32.mrf.mxu0
    %v515 = vadd.f32 %v466, %v514
    %516 = vdwg.mxu0
    %v517 = vsub.f32 %v63, %v503
    %v518 = vsub.f32 %v64, %v507
    %v519 = vsub.f32 %v65, %v511
    %v520 = vsub.f32 %v66, %v515
    %v521 = vmul.f32 %v517, %v517
    %v522 = vmul.f32 %v518, %v518
    %v523 = vmul.f32 %v519, %v519
    %v524 = vmul.f32 %v520, %v520
    %v525 = vand.u32 %v82, 4294901760
    %526 = vmatpush.msra.mxu0 %v525
    %v527 = vand.u32 %v81, 4294901760
    %528 = vmatpush.msra.mxu0 %v527
    %v529 = vand.u32 %v80, 4294901760
    %530 = vmatpush.msra.mxu0 %v529
    %v531 = vand.u32 %v79, 4294901760
    %532 = vmatpush.msra.mxu0 %v531
    %v533 = vand.u32 %v78, 4294901760
    %534 = vmatpush.msra.mxu0 %v533
    %v535 = vand.u32 %v77, 4294901760
    %536 = vmatpush.msra.mxu0 %v535
    %v537 = vand.u32 %v76, 4294901760
    %538 = vmatpush.msra.mxu0 %v537
    %v539 = vand.u32 %v75, 4294901760
    %540 = vmatpush.msra.mxu0 %v539
    %v541 = vand.u32 %v74, 4294901760
    %542 = vmatpush.msra.mxu0 %v541
    %v543 = vand.u32 %v73, 4294901760
    %544 = vmatpush.msra.mxu0 %v543
    %v545 = vand.u32 %v72, 4294901760
    %546 = vmatpush.msra.mxu0 %v545
    %v547 = vand.u32 %v71, 4294901760
    %548 = vmatpush.msra.mxu0 %v547
    %v549 = vand.u32 %v70, 4294901760
    %550 = vmatpush.msra.mxu0 %v549
    %v551 = vand.u32 %v69, 4294901760
    %552 = vmatpush.msra.mxu0 %v551
    %v553 = vand.u32 %v68, 4294901760
    %554 = vmatpush.msra.mxu0 %v553
    %v555 = vand.u32 %v67, 4294901760
    %556 = vmatpush.msra.mxu0 %v555
    %v557 = vand.u32 %v521, 4294901760
    %v558 = vsub.f32 %v521, %v557
    %v559 = vand.u32 %v558, 4294901760
    %v560 = vsub.f32 %v558, %v559
    %v561 = vand.u32 %v560, 4294901760
    %562 = vmatmul.f32.gmra.mxu0 %v561
    %v563 = vpop.f32.mrf.mxu0
    %v564 = vadd.f32 1e-05, %v563
    %v565 = vand.u32 %v522, 4294901760
    %v566 = vsub.f32 %v522, %v565
    %v567 = vand.u32 %v566, 4294901760
    %v568 = vsub.f32 %v566, %v567
    %v569 = vand.u32 %v568, 4294901760
    %570 = vmatmul.f32.gmra.mxu0 %v569
    %v571 = vpop.f32.mrf.mxu0
    %v572 = vadd.f32 1e-05, %v571
    %v573 = vand.u32 %v523, 4294901760
    %v574 = vsub.f32 %v523, %v573
    %v575 = vand.u32 %v574, 4294901760
    %v576 = vsub.f32 %v574, %v575
    %v577 = vand.u32 %v576, 4294901760
    %578 = vmatmul.f32.gmra.mxu0 %v577
    %v579 = vpop.f32.mrf.mxu0
    %v580 = vadd.f32 1e-05, %v579
    %v581 = vand.u32 %v524, 4294901760
    %v582 = vsub.f32 %v524, %v581
    %v583 = vand.u32 %v582, 4294901760
    %v584 = vsub.f32 %v582, %v583
    %v585 = vand.u32 %v584, 4294901760
    %586 = vmatmul.f32.gmra.mxu0 %v585
    %v587 = vpop.f32.mrf.mxu0
    %v588 = vadd.f32 1e-05, %v587
    %589 = vdwg.mxu0
    %v590 = vand.u32 %v82, 4294901760
    %v591 = vsub.f32 %v82, %v590
    %v592 = vand.u32 %v591, 4294901760
    %v593 = vsub.f32 %v591, %v592
    %v594 = vand.u32 %v593, 4294901760
    %595 = vmatpush.msra.mxu0 %v594
    %v596 = vand.u32 %v81, 4294901760
    %v597 = vsub.f32 %v81, %v596
    %v598 = vand.u32 %v597, 4294901760
    %v599 = vsub.f32 %v597, %v598
    %v600 = vand.u32 %v599, 4294901760
    %601 = vmatpush.msra.mxu0 %v600
    %v602 = vand.u32 %v80, 4294901760
    %v603 = vsub.f32 %v80, %v602
    %v604 = vand.u32 %v603, 4294901760
    %v605 = vsub.f32 %v603, %v604
    %v606 = vand.u32 %v605, 4294901760
    %607 = vmatpush.msra.mxu0 %v606
    %v608 = vand.u32 %v79, 4294901760
    %v609 = vsub.f32 %v79, %v608
    %v610 = vand.u32 %v609, 4294901760
    %v611 = vsub.f32 %v609, %v610
    %v612 = vand.u32 %v611, 4294901760
    %613 = vmatpush.msra.mxu0 %v612
    %v614 = vand.u32 %v78, 4294901760
    %v615 = vsub.f32 %v78, %v614
    %v616 = vand.u32 %v615, 4294901760
    %v617 = vsub.f32 %v615, %v616
    %v618 = vand.u32 %v617, 4294901760
    %619 = vmatpush.msra.mxu0 %v618
    %v620 = vand.u32 %v77, 4294901760
    %v621 = vsub.f32 %v77, %v620
    %v622 = vand.u32 %v621, 4294901760
    %v623 = vsub.f32 %v621, %v622
    %v624 = vand.u32 %v623, 4294901760
    %625 = vmatpush.msra.mxu0 %v624
    %v626 = vand.u32 %v76, 4294901760
    %v627 = vsub.f32 %v76, %v626
    %v628 = vand.u32 %v627, 4294901760
    %v629 = vsub.f32 %v627, %v628
    %v630 = vand.u32 %v629, 4294901760
    %631 = vmatpush.msra.mxu0 %v630
    %v632 = vand.u32 %v75, 4294901760
    %v633 = vsub.f32 %v75, %v632
    %v634 = vand.u32 %v633, 4294901760
    %v635 = vsub.f32 %v633, %v634
    %v636 = vand.u32 %v635, 4294901760
    %637 = vmatpush.msra.mxu0 %v636
    %v638 = vand.u32 %v74, 4294901760
    %v639 = vsub.f32 %v74, %v638
    %v640 = vand.u32 %v639, 4294901760
    %v641 = vsub.f32 %v639, %v640
    %v642 = vand.u32 %v641, 4294901760
    %643 = vmatpush.msra.mxu0 %v642
    %v644 = vand.u32 %v73, 4294901760
    %v645 = vsub.f32 %v73, %v644
    %v646 = vand.u32 %v645, 4294901760
    %v647 = vsub.f32 %v645, %v646
    %v648 = vand.u32 %v647, 4294901760
    %649 = vmatpush.msra.mxu0 %v648
    %v650 = vand.u32 %v72, 4294901760
    %v651 = vsub.f32 %v72, %v650
    %v652 = vand.u32 %v651, 4294901760
    %v653 = vsub.f32 %v651, %v652
    %v654 = vand.u32 %v653, 4294901760
    %655 = vmatpush.msra.mxu0 %v654
    %v656 = vand.u32 %v71, 4294901760
    %v657 = vsub.f32 %v71, %v656
    %v658 = vand.u32 %v657, 4294901760
    %v659 = vsub.f32 %v657, %v658
    %v660 = vand.u32 %v659, 4294901760
    %661 = vmatpush.msra.mxu0 %v660
    %v662 = vand.u32 %v70, 4294901760
    %v663 = vsub.f32 %v70, %v662
    %v664 = vand.u32 %v663, 4294901760
    %v665 = vsub.f32 %v663, %v664
    %v666 = vand.u32 %v665, 4294901760
    %667 = vmatpush.msra.mxu0 %v666
    %v668 = vand.u32 %v69, 4294901760
    %v669 = vsub.f32 %v69, %v668
    %v670 = vand.u32 %v669, 4294901760
    %v671 = vsub.f32 %v669, %v670
    %v672 = vand.u32 %v671, 4294901760
    %673 = vmatpush.msra.mxu0 %v672
    %v674 = vand.u32 %v68, 4294901760
    %v675 = vsub.f32 %v68, %v674
    %v676 = vand.u32 %v675, 4294901760
    %v677 = vsub.f32 %v675, %v676
    %v678 = vand.u32 %v677, 4294901760
    %679 = vmatpush.msra.mxu0 %v678
    %v680 = vand.u32 %v67, 4294901760
    %v681 = vsub.f32 %v67, %v680
    %v682 = vand.u32 %v681, 4294901760
    %v683 = vsub.f32 %v681, %v682
    %v684 = vand.u32 %v683, 4294901760
    %685 = vmatpush.msra.mxu0 %v684
    %v686 = vand.u32 %v521, 4294901760
    %687 = vmatmul.f32.gmra.mxu0 %v686
    %v688 = vpop.f32.mrf.mxu0
    %v689 = vadd.f32 %v564, %v688
    %v690 = vand.u32 %v522, 4294901760
    %691 = vmatmul.f32.gmra.mxu0 %v690
    %v692 = vpop.f32.mrf.mxu0
    %v693 = vadd.f32 %v572, %v692
    %v694 = vand.u32 %v523, 4294901760
    %695 = vmatmul.f32.gmra.mxu0 %v694
    %v696 = vpop.f32.mrf.mxu0
    %v697 = vadd.f32 %v580, %v696
    %v698 = vand.u32 %v524, 4294901760
    %699 = vmatmul.f32.gmra.mxu0 %v698
    %v700 = vpop.f32.mrf.mxu0
    %v701 = vadd.f32 %v588, %v700
    %702 = vdwg.mxu0
    %v703 = vand.u32 %v82, 4294901760
    %v704 = vsub.f32 %v82, %v703
    %705 = vmatpush.msra.mxu0 %v704
    %v706 = vand.u32 %v81, 4294901760
    %v707 = vsub.f32 %v81, %v706
    %708 = vmatpush.msra.mxu0 %v707
    %v709 = vand.u32 %v80, 4294901760
    %v710 = vsub.f32 %v80, %v709
    %711 = vmatpush.msra.mxu0 %v710
    %v712 = vand.u32 %v79, 4294901760
    %v713 = vsub.f32 %v79, %v712
    %714 = vmatpush.msra.mxu0 %v713
    %v715 = vand.u32 %v78, 4294901760
    %v716 = vsub.f32 %v78, %v715
    %717 = vmatpush.msra.mxu0 %v716
    %v718 = vand.u32 %v77, 4294901760
    %v719 = vsub.f32 %v77, %v718
    %720 = vmatpush.msra.mxu0 %v719
    %v721 = vand.u32 %v76, 4294901760
    %v722 = vsub.f32 %v76, %v721
    %723 = vmatpush.msra.mxu0 %v722
    %v724 = vand.u32 %v75, 4294901760
    %v725 = vsub.f32 %v75, %v724
    %726 = vmatpush.msra.mxu0 %v725
    %v727 = vand.u32 %v74, 4294901760
    %v728 = vsub.f32 %v74, %v727
    %729 = vmatpush.msra.mxu0 %v728
    %v730 = vand.u32 %v73, 4294901760
    %v731 = vsub.f32 %v73, %v730
    %732 = vmatpush.msra.mxu0 %v731
    %v733 = vand.u32 %v72, 4294901760
    %v734 = vsub.f32 %v72, %v733
    %735 = vmatpush.msra.mxu0 %v734
    %v736 = vand.u32 %v71, 4294901760
    %v737 = vsub.f32 %v71, %v736
    %738 = vmatpush.msra.mxu0 %v737
    %v739 = vand.u32 %v70, 4294901760
    %v740 = vsub.f32 %v70, %v739
    %741 = vmatpush.msra.mxu0 %v740
    %v742 = vand.u32 %v69, 4294901760
    %v743 = vsub.f32 %v69, %v742
    %744 = vmatpush.msra.mxu0 %v743
    %v745 = vand.u32 %v68, 4294901760
    %v746 = vsub.f32 %v68, %v745
    %747 = vmatpush.msra.mxu0 %v746
    %v748 = vand.u32 %v67, 4294901760
    %v749 = vsub.f32 %v67, %v748
    %750 = vmatpush.msra.mxu0 %v749
    %v751 = vand.u32 %v521, 4294901760
    %v752 = vsub.f32 %v521, %v751
    %753 = vmatmul.f32.gmra.mxu0 %v752
    %v754 = vpop.f32.mrf.mxu0
    %v755 = vadd.f32 %v689, %v754
    %v756 = vand.u32 %v522, 4294901760
    %v757 = vsub.f32 %v522, %v756
    %758 = vmatmul.f32.gmra.mxu0 %v757
    %v759 = vpop.f32.mrf.mxu0
    %v760 = vadd.f32 %v693, %v759
    %v761 = vand.u32 %v523, 4294901760
    %v762 = vsub.f32 %v523, %v761
    %763 = vmatmul.f32.gmra.mxu0 %v762
    %v764 = vpop.f32.mrf.mxu0
    %v765 = vadd.f32 %v697, %v764
    %v766 = vand.u32 %v524, 4294901760
    %v767 = vsub.f32 %v524, %v766
    %768 = vmatmul.f32.gmra.mxu0 %v767
    %v769 = vpop.f32.mrf.mxu0
    %v770 = vadd.f32 %v701, %v769
    %771 = vdwg.mxu0
    %v772 = vand.u32 %v82, 4294901760
    %773 = vmatpush.msra.mxu0 %v772
    %v774 = vand.u32 %v81, 4294901760
    %775 = vmatpush.msra.mxu0 %v774
    %v776 = vand.u32 %v80, 4294901760
    %777 = vmatpush.msra.mxu0 %v776
    %v778 = vand.u32 %v79, 4294901760
    %779 = vmatpush.msra.mxu0 %v778
    %v780 = vand.u32 %v78, 4294901760
    %781 = vmatpush.msra.mxu0 %v780
    %v782 = vand.u32 %v77, 4294901760
    %783 = vmatpush.msra.mxu0 %v782
    %v784 = vand.u32 %v76, 4294901760
    %785 = vmatpush.msra.mxu0 %v784
    %v786 = vand.u32 %v75, 4294901760
    %787 = vmatpush.msra.mxu0 %v786
    %v788 = vand.u32 %v74, 4294901760
    %789 = vmatpush.msra.mxu0 %v788
    %v790 = vand.u32 %v73, 4294901760
    %791 = vmatpush.msra.mxu0 %v790
    %v792 = vand.u32 %v72, 4294901760
    %793 = vmatpush.msra.mxu0 %v792
    %v794 = vand.u32 %v71, 4294901760
    %795 = vmatpush.msra.mxu0 %v794
    %v796 = vand.u32 %v70, 4294901760
    %797 = vmatpush.msra.mxu0 %v796
    %v798 = vand.u32 %v69, 4294901760
    %799 = vmatpush.msra.mxu0 %v798
    %v800 = vand.u32 %v68, 4294901760
    %801 = vmatpush.msra.mxu0 %v800
    %v802 = vand.u32 %v67, 4294901760
    %803 = vmatpush.msra.mxu0 %v802
    %v804 = vand.u32 %v521, 4294901760
    %v805 = vsub.f32 %v521, %v804
    %v806 = vand.u32 %v805, 4294901760
    %807 = vmatmul.f32.gmra.mxu0 %v806
    %v808 = vpop.f32.mrf.mxu0
    %v809 = vadd.f32 %v755, %v808
    %v810 = vand.u32 %v522, 4294901760
    %v811 = vsub.f32 %v522, %v810
    %v812 = vand.u32 %v811, 4294901760
    %813 = vmatmul.f32.gmra.mxu0 %v812
    %v814 = vpop.f32.mrf.mxu0
    %v815 = vadd.f32 %v760, %v814
    %v816 = vand.u32 %v523, 4294901760
    %v817 = vsub.f32 %v523, %v816
    %v818 = vand.u32 %v817, 4294901760
    %819 = vmatmul.f32.gmra.mxu0 %v818
    %v820 = vpop.f32.mrf.mxu0
    %v821 = vadd.f32 %v765, %v820
    %v822 = vand.u32 %v524, 4294901760
    %v823 = vsub.f32 %v524, %v822
    %v824 = vand.u32 %v823, 4294901760
    %825 = vmatmul.f32.gmra.mxu0 %v824
    %v826 = vpop.f32.mrf.mxu0
    %v827 = vadd.f32 %v770, %v826
    %828 = vdwg.mxu0
    %v829 = vand.u32 %v82, 4294901760
    %v830 = vsub.f32 %v82, %v829
    %v831 = vand.u32 %v830, 4294901760
    %832 = vmatpush.msra.mxu0 %v831
    %v833 = vand.u32 %v81, 4294901760
    %v834 = vsub.f32 %v81, %v833
    %v835 = vand.u32 %v834, 4294901760
    %836 = vmatpush.msra.mxu0 %v835
    %v837 = vand.u32 %v80, 4294901760
    %v838 = vsub.f32 %v80, %v837
    %v839 = vand.u32 %v838, 4294901760
    %840 = vmatpush.msra.mxu0 %v839
    %v841 = vand.u32 %v79, 4294901760
    %v842 = vsub.f32 %v79, %v841
    %v843 = vand.u32 %v842, 4294901760
    %844 = vmatpush.msra.mxu0 %v843
    %v845 = vand.u32 %v78, 4294901760
    %v846 = vsub.f32 %v78, %v845
    %v847 = vand.u32 %v846, 4294901760
    %848 = vmatpush.msra.mxu0 %v847
    %v849 = vand.u32 %v77, 4294901760
    %v850 = vsub.f32 %v77, %v849
    %v851 = vand.u32 %v850, 4294901760
    %852 = vmatpush.msra.mxu0 %v851
    %v853 = vand.u32 %v76, 4294901760
    %v854 = vsub.f32 %v76, %v853
    %v855 = vand.u32 %v854, 4294901760
    %856 = vmatpush.msra.mxu0 %v855
    %v857 = vand.u32 %v75, 4294901760
    %v858 = vsub.f32 %v75, %v857
    %v859 = vand.u32 %v858, 4294901760
    %860 = vmatpush.msra.mxu0 %v859
    %v861 = vand.u32 %v74, 4294901760
    %v862 = vsub.f32 %v74, %v861
    %v863 = vand.u32 %v862, 4294901760
    %864 = vmatpush.msra.mxu0 %v863
    %v865 = vand.u32 %v73, 4294901760
    %v866 = vsub.f32 %v73, %v865
    %v867 = vand.u32 %v866, 4294901760
    %868 = vmatpush.msra.mxu0 %v867
    %v869 = vand.u32 %v72, 4294901760
    %v870 = vsub.f32 %v72, %v869
    %v871 = vand.u32 %v870, 4294901760
    %872 = vmatpush.msra.mxu0 %v871
    %v873 = vand.u32 %v71, 4294901760
    %v874 = vsub.f32 %v71, %v873
    %v875 = vand.u32 %v874, 4294901760
    %876 = vmatpush.msra.mxu0 %v875
    %v877 = vand.u32 %v70, 4294901760
    %v878 = vsub.f32 %v70, %v877
    %v879 = vand.u32 %v878, 4294901760
    %880 = vmatpush.msra.mxu0 %v879
    %v881 = vand.u32 %v69, 4294901760
    %v882 = vsub.f32 %v69, %v881
    %v883 = vand.u32 %v882, 4294901760
    %884 = vmatpush.msra.mxu0 %v883
    %v885 = vand.u32 %v68, 4294901760
    %v886 = vsub.f32 %v68, %v885
    %v887 = vand.u32 %v886, 4294901760
    %888 = vmatpush.msra.mxu0 %v887
    %v889 = vand.u32 %v67, 4294901760
    %v890 = vsub.f32 %v67, %v889
    %v891 = vand.u32 %v890, 4294901760
    %892 = vmatpush.msra.mxu0 %v891
    %v893 = vand.u32 %v521, 4294901760
    %894 = vmatmul.f32.gmra.mxu0 %v893
    %v895 = vpop.f32.mrf.mxu0
    %v896 = vadd.f32 %v809, %v895
    %v897 = vand.u32 %v522, 4294901760
    %898 = vmatmul.f32.gmra.mxu0 %v897
    %v899 = vpop.f32.mrf.mxu0
    %v900 = vadd.f32 %v815, %v899
    %v901 = vand.u32 %v523, 4294901760
    %902 = vmatmul.f32.gmra.mxu0 %v901
    %v903 = vpop.f32.mrf.mxu0
    %v904 = vadd.f32 %v821, %v903
    %v905 = vand.u32 %v524, 4294901760
    %906 = vmatmul.f32.gmra.mxu0 %v905
    %v907 = vpop.f32.mrf.mxu0
    %v908 = vadd.f32 %v827, %v907
    %909 = vdwg.mxu0
    %v910 = vand.u32 %v82, 4294901760
    %911 = vmatpush.msra.mxu0 %v910
    %v912 = vand.u32 %v81, 4294901760
    %913 = vmatpush.msra.mxu0 %v912
    %v914 = vand.u32 %v80, 4294901760
    %915 = vmatpush.msra.mxu0 %v914
    %v916 = vand.u32 %v79, 4294901760
    %917 = vmatpush.msra.mxu0 %v916
    %v918 = vand.u32 %v78, 4294901760
    %919 = vmatpush.msra.mxu0 %v918
    %v920 = vand.u32 %v77, 4294901760
    %921 = vmatpush.msra.mxu0 %v920
    %v922 = vand.u32 %v76, 4294901760
    %923 = vmatpush.msra.mxu0 %v922
    %v924 = vand.u32 %v75, 4294901760
    %925 = vmatpush.msra.mxu0 %v924
    %v926 = vand.u32 %v74, 4294901760
    %927 = vmatpush.msra.mxu0 %v926
    %v928 = vand.u32 %v73, 4294901760
    %929 = vmatpush.msra.mxu0 %v928
    %v930 = vand.u32 %v72, 4294901760
    %931 = vmatpush.msra.mxu0 %v930
    %v932 = vand.u32 %v71, 4294901760
    %933 = vmatpush.msra.mxu0 %v932
    %v934 = vand.u32 %v70, 4294901760
    %935 = vmatpush.msra.mxu0 %v934
    %v936 = vand.u32 %v69, 4294901760
    %937 = vmatpush.msra.mxu0 %v936
    %v938 = vand.u32 %v68, 4294901760
    %939 = vmatpush.msra.mxu0 %v938
    %v940 = vand.u32 %v67, 4294901760
    %941 = vmatpush.msra.mxu0 %v940
    %v942 = vand.u32 %v521, 4294901760
    %943 = vmatmul.f32.gmra.mxu0 %v942
    %v944 = vpop.f32.mrf.mxu0
    %v945 = vadd.f32 %v896, %v944
    %v946 = vand.u32 %v522, 4294901760
    %947 = vmatmul.f32.gmra.mxu0 %v946
    %v948 = vpop.f32.mrf.mxu0
    %v949 = vadd.f32 %v900, %v948
    %v950 = vand.u32 %v523, 4294901760
    %951 = vmatmul.f32.gmra.mxu0 %v950
    %v952 = vpop.f32.mrf.mxu0
    %v953 = vadd.f32 %v904, %v952
    %v954 = vand.u32 %v524, 4294901760
    %955 = vmatmul.f32.gmra.mxu0 %v954
    %v956 = vpop.f32.mrf.mxu0
    %v957 = vadd.f32 %v908, %v956
    %958 = vdwg.mxu0
    %v959 = vrsqrt.pop %v945
    %v960 = vmul.f32 %v959, %v945
    %v961 = vmul.f32 %v960, %v959
    %v962 = vmul.f32 0.5, %v961
    %v963 = vsub.f32 1.5, %v962
    %v964 = vmul.f32 %v959, %v963
    %vm965 = vweird.f32 %v945
    %vm966 = vweird.f32 %v959
    %vm967 = vmor %vm965, %vm966
    %v968 = vsel %vm967, %v959, %v964
    %v969 = vrsqrt.pop %v949
    %v970 = vmul.f32 %v969, %v949
    %v971 = vmul.f32 %v970, %v969
    %v972 = vmul.f32 0.5, %v971
    %v973 = vsub.f32 1.5, %v972
    %v974 = vmul.f32 %v969, %v973
    %vm975 = vweird.f32 %v949
    %vm976 = vweird.f32 %v969
    %vm977 = vmor %vm975, %vm976
    %v978 = vsel %vm977, %v969, %v974
    %v979 = vrsqrt.pop %v953
    %v980 = vmul.f32 %v979, %v953
    %v981 = vmul.f32 %v980, %v979
    %v982 = vmul.f32 0.5, %v981
    %v983 = vsub.f32 1.5, %v982
    %v984 = vmul.f32 %v979, %v983
    %vm985 = vweird.f32 %v953
    %vm986 = vweird.f32 %v979
    %vm987 = vmor %vm985, %vm986
    %v988 = vsel %vm987, %v979, %v984
    %v989 = vrsqrt.pop %v957
    %v990 = vmul.f32 %v989, %v957
    %v991 = vmul.f32 %v990, %v989
    %v992 = vmul.f32 0.5, %v991
    %v993 = vsub.f32 1.5, %v992
    %v994 = vmul.f32 %v989, %v993
    %vm995 = vweird.f32 %v957
    %vm996 = vweird.f32 %v989
    %vm997 = vmor %vm995, %vm996
    %v998 = vsel %vm997, %v989, %v994
    %v999 = vmul.f32 %v517, %v968
    %v1000 = vmul.f32 %v518, %v978
    %v1001 = vmul.f32 %v519, %v988
    %v1002 = vmul.f32 %v520, %v998
    %v1003 = vld [vmem:[#allocation5] sm:$0x1]
    %v1005 = vperm.slane %v1003, 0
    %v1007 = vmul.f32 %v999, %v1005
    %v1008 = vmul.f32 %v1000, %v1005
    %v1009 = vmul.f32 %v1001, %v1005
    %v1010 = vmul.f32 %v1002, %v1005
    %v1011 = vld [vmem:[%s2] sm:$0x1]
    %v1013 = vperm.slane %v1011, 0
    %v1015 = vadd.f32 %v1007, %v1013
    %v1016 = vadd.f32 %v1008, %v1013
    %v1017 = vadd.f32 %v1009, %v1013
    %v1018 = vadd.f32 %v1010, %v1013
    %1019 = vst [vmem:[#allocation8] sm:$0xff] %v1015
    %1020 = vst [vmem:[#allocation8 + $0x8] sm:$0xff] %v1016
    %1021 = vst [vmem:[#allocation8 + $0x10] sm:$0xff] %v1017
    %1022 = vst [vmem:[#allocation8 + $0x18] sm:$0xff] %v1018
    // Predicated region
    $region30: #{tpu_custom_call.1} parent=1 // pred_check
      _
    $region31: #{tpu_custom_call.1} parent=1 // pred_check_branch
      %1024 = sbr.rel (0) target = $region33
    $region32: #{tpu_custom_call.1} parent=1 // pred_region
      %1026 = vsyncadd [#allocation4], 0
      %s1027 = sshll.u32 [#allocation8], 4
      %s1028 = int_to_ptr.vmem [resolvable:$true] %s1027
      %s1029 = sshll.u32 %s4, 4
      %s1030 = int_to_ptr.hbm [resolvable:$true] %s1029
      %1035 = dma.vmem_to_hbm [thread:$0]  %s1028, 512, %s1030, [#allocation4], 128, 128, 8
    $region33: #{tpu_custom_call.1} parent=1 // pred_fallthru
      _
    // Predicated region
    $region34: #{tpu_custom_call.1} parent=1 // pred_check
      _
    $region35: #{tpu_custom_call.1} parent=1 // pred_check_branch
      %1037 = sbr.rel (0) target = $region37
    $region36: #{tpu_custom_call.1} parent=1 // pred_region
      %1039 = dma.done [#allocation4], 512
    $region37: #{tpu_custom_call.1} parent=1 // pred_fallthru
      _
    %1040 = vsyncpa [#allocation3], 1
    %1041 = vsyncpa [#allocation6], 1
    %1042 = vsyncpa [#allocation4], 1

</llo_original>
